<compile_context>
chip_gen: v5e
topology: v5e:2x2
jax: 0.10.0
libtpu: 0.0.40
codegen_flags: <defaults>
</compile_context>

<pallas_src>
import functools
import math
from typing import NamedTuple

import jax
import jax.numpy as jnp
from jax.experimental import pallas as pl
from jax.experimental.pallas import tpu as pltpu


def _round_up(x, m):
    return ((x + m - 1) // m) * m


def _lcm(a, b):
    return a * b // math.gcd(a, b)


class Geometry(NamedTuple):
    tc: int        # comm-chunk rows (block-diag aggregation tile)
    tm: int        # rows per grid step (multiple of tc)
    n_pad: int     # padded total rows
    n_chunks: int  # tm // tc
    grid: int      # n_pad // tm


def _default_tc_target():
    # v5e: 128-wide MXU and ~4.7x less bf16 throughput -> keep the block-diag
    # aggregation tile at 128.  v6e/v7x: 256 exactly fills the 256-deep MXU.
    try:
        kind = jax.devices()[0].device_kind.lower()
        if "v5 lite" in kind or "v5e" in kind or "v5litepod" in kind:
            return 128
    except Exception:
        pass
    return 256


def compute_geometry(n_rows, n_agents, *, tc_target=None, target_rows=512):
    assert n_rows % n_agents == 0, "rows must be batch * n_agents"
    if tc_target is None:
        tc_target = _default_tc_target()
    # bf16 output packs (16, 128) tiles; keep padding a whole number of agent
    # groups so fake rows never mix into real batches via the block-diag comm.
    unit = _lcm(n_agents, 16)
    n_pad0 = _round_up(n_rows, unit)
    tc = max(unit, (tc_target // unit) * unit)
    if n_pad0 <= tc:
        tc = n_pad0
        tm = n_pad0
    else:
        n_ch_total = _round_up(n_pad0, tc) // tc
        max_chunks = max(1, target_rows // tc)
        # Grow the tile to amortize the ~0.35 us per-grid-step overhead, but
        # keep >= 2 grid steps so v7x megacore has rows to split across TCs.
        chunks_per_tile = min(max_chunks, max(1, n_ch_total // 2))
        tm = chunks_per_tile * tc
    n_pad = _round_up(n_rows, tm)
    return Geometry(tc=tc, tm=tm, n_pad=n_pad, n_chunks=tm // tc,
                    grid=n_pad // tm)


# ----------------------------------------------------------------------------
# Kernel: per row-tile, loop over Tc-row chunks; both channels fused via
# block-diagonal weights; single packed lane-dense bf16 store per chunk.
# ----------------------------------------------------------------------------
def _dual_gnn_kernel(num_layers, n_chunks, tc,
                     x_ref, comm_ref, we_ref, be_ref, wm_ref,
                     wpe_ref, wpm_ref, bp_ref, wact_ref, bact_ref,
                     out_ref):
    f32 = jnp.float32
    cdt = we_ref.dtype  # MXU operand dtype (bf16)

    # Hoist resident weight loads out of the chunk loop.
    comm = comm_ref[...]                 # (tc, tc) kron(I, adj), 0/1 -> exact bf16
    we, be, wm = we_ref[...], be_ref[...], wm_ref[...]
    wpe, wpm, bp = wpe_ref[...], wpm_ref[...], bp_ref[...]
    wact, bact = wact_ref[...], bact_ref[...]

    def compute(x_blk):
        xc = x_blk.astype(cdt)                                          # (tc, F)
        enc_f = jnp.maximum(
            jnp.dot(xc, we, preferred_element_type=f32) + be, 0.0)      # (tc, 2H)
        enc = enc_f.astype(cdt)
        # Policy head accumulates straight into the packed lane layout.
        h_acc = jnp.dot(enc, wpe, preferred_element_type=f32)           # (tc, PW)
        msg = enc
        for _ in range(num_layers):
            agg = jnp.dot(comm, msg, preferred_element_type=f32)        # (tc, 2H)
            msg = jnp.maximum(
                jnp.dot(agg.astype(cdt), wm, preferred_element_type=f32),
                0.0).astype(cdt)
        h_acc = h_acc + jnp.dot(msg, wpm, preferred_element_type=f32)
        h_f = jnp.maximum(h_acc + bp, 0.0)      # (tc, PW): h in lanes [0:2H], 0 after
        act_f = jnp.dot(h_f.astype(cdt), wact,
                        preferred_element_type=f32) + bact              # act in [2H:2H+A]
        return h_f + act_f                      # packed [ h | act | 0 ], disjoint lanes

    if n_chunks == 1:
        out_ref[...] = compute(x_ref[...]).astype(out_ref.dtype)
    else:
        def body(c, carry):
            r0 = pl.multiple_of(c * tc, tc)
            out_ref[pl.ds(r0, tc), :] = compute(
                x_ref[pl.ds(r0, tc), :]).astype(out_ref.dtype)
            return carry
        jax.lax.fori_loop(0, n_chunks, body, 0, unroll=True)


# ----------------------------------------------------------------------------
# One-time constant prep (hoisted out of the per-call path).
# ----------------------------------------------------------------------------
def prepare_constants(adj, params, geom, *, n_agents, num_layers, hidden_dim,
                      n_actions, matmul_dtype=jnp.bfloat16):
    assert num_layers >= 1, "num_layers == 0 path not implemented"
    H = hidden_dim
    PW = _round_up(2 * H + n_actions, 128)       # packed output lane width
    f32, cdt = jnp.float32, matmul_dtype
    blkdiag = jax.scipy.linalg.block_diag
    p = params

    def place(mat, row_off, col_off, rows, cols):
        z = jnp.zeros((rows, cols), f32)
        return z.at[row_off:row_off + mat.shape[0],
                    col_off:col_off + mat.shape[1]].set(mat.astype(f32))

    # Chunk-local block-diagonal communication matrix; 0/1 adjacency is exact
    # in bf16 (normalize_adj_matrix=True would require f32 here).
    comm = jnp.kron(jnp.eye(geom.tc // n_agents, dtype=f32),
                    adj.astype(f32)).astype(cdt)                        # (Tc, Tc)

    we = blkdiag(p["wea"], p["web"]).astype(cdt)                        # (F, 2H)
    be = jnp.concatenate([p["bea"], p["beb"]], axis=-1).astype(f32)     # (1, 2H)
    wm = blkdiag(p["wma"], p["wmb"]).astype(cdt)                        # (2H, 2H)
    wpe = blkdiag(p["wpa"][:H], p["wpb"][:H])                           # (2H, 2H)
    wpm = blkdiag(p["wpa"][H:], p["wpb"][H:])                           # (2H, 2H)
    bp = jnp.concatenate([p["bpa"], p["bpb"]], axis=-1)                 # (1, 2H)

    # Packed output layout: lanes [0:2H] = h, lanes [2H:2H+n_actions] = act.
    return dict(
        comm=comm, we=we, be=be, wm=wm,
        wpe=place(wpe, 0, 0, 2 * H, PW).astype(cdt),
        wpm=place(wpm, 0, 0, 2 * H, PW).astype(cdt),
        bp=place(bp, 0, 0, 1, PW),
        wact=place(p["wact"], 0, 2 * H, PW, PW).astype(cdt),
        bact=place(p["bact"], 0, 2 * H, 1, PW),
    )


# ----------------------------------------------------------------------------
# Forward: returns the packed padded (n_pad, PW) bf16 buffer.  No post-kernel
# slicing here — consumers unpack lazily (unpack_outputs) to avoid an extra
# HBM read+write pass over the outputs.
# ----------------------------------------------------------------------------
def dual_channel_gnn_forward(x, consts, geom, *, num_layers, hidden_dim,
                             n_actions):
    N, F = x.shape
    PW = _round_up(2 * hidden_dim + n_actions, 128)
    if geom.n_pad != N:
        x = jnp.pad(x, ((0, geom.n_pad - N), (0, 0)))   # fake agent groups only

    kernel = functools.partial(_dual_gnn_kernel, num_layers, geom.n_chunks,
                               geom.tc)

    def const_spec(shape):
        return pl.BlockSpec(shape, lambda i: (0, 0))    # resident across the grid

    in_specs = [
        pl.BlockSpec((geom.tm, F), lambda i: (i, 0)),   # pipelined row tiles
        const_spec(consts["comm"].shape),
        const_spec(consts["we"].shape),
        const_spec(consts["be"].shape),
        const_spec(consts["wm"].shape),
        const_spec(consts["wpe"].shape),
        const_spec(consts["wpm"].shape),
        const_spec(consts["bp"].shape),
        const_spec(consts["wact"].shape),
        const_spec(consts["bact"].shape),
    ]
    out_specs = pl.BlockSpec((geom.tm, PW), lambda i: (i, 0))

    return pl.pallas_call(
        kernel,
        grid=(geom.grid,),
        in_specs=in_specs,
        out_specs=out_specs,
        out_shape=jax.ShapeDtypeStruct((geom.n_pad, PW), jnp.bfloat16),
        compiler_params=pltpu.CompilerParams(
            dimension_semantics=("parallel",),
            vmem_limit_bytes=32 * 1024 * 1024),
    )(x, consts["comm"], consts["we"], consts["be"], consts["wm"],
      consts["wpe"], consts["wpm"], consts["bp"], consts["wact"],
      consts["bact"])


def unpack_outputs(packed, n_rows, hidden_dim, n_actions):
    """Consumer-side unpack of the packed buffer into (actions, h)."""
    H2 = 2 * hidden_dim
    h = packed[:n_rows, :H2].astype(jnp.float32)
    act = packed[:n_rows, H2:H2 + n_actions].astype(jnp.float32)
    return act, h


# ----------------------------------------------------------------------------
# Params + pure-JAX reference (mirrors the PyTorch module; same bf16 MXU
# operand rounding as the kernel so the correctness check can be tight).
# ----------------------------------------------------------------------------
def init_params(key, f_a, f_b, hidden_dim, n_actions):
    keys = jax.random.split(key, 12)
    s = 0.1

    def w(k, shape):
        return jax.random.normal(k, shape, jnp.float32) * s

    H = hidden_dim
    # NOTE: per-channel GNNAgent.actions heads are dead code in the
    # DualChannelGNNAgent forward (outputs discarded) and are omitted.
    return dict(
        wea=w(keys[0], (f_a, H)),    bea=w(keys[1], (1, H)),
        wma=w(keys[2], (H, H)),
        wpa=w(keys[3], (2 * H, H)),  bpa=w(keys[4], (1, H)),
        web=w(keys[5], (f_b, H)),    beb=w(keys[6], (1, H)),
        wmb=w(keys[7], (H, H)),
        wpb=w(keys[8], (2 * H, H)),  bpb=w(keys[9], (1, H)),
        wact=w(keys[10], (2 * H, n_actions)), bact=w(keys[11], (1, n_actions)),
    )


def _reference_forward(x, adj, params, *, n_agents, num_layers, input_shape_a,
                       matmul_dtype=jnp.bfloat16):
    f32 = jnp.float32
    cdt = matmul_dtype

    def mm(a, b):
        return jnp.dot(a.astype(cdt), b.astype(cdt), preferred_element_type=f32)

    def channel(xc, we, be, wm, wp, bp):
        enc = jnp.maximum(mm(xc, we) + be, 0.0)                    # (N, H)
        B = xc.shape[0] // n_agents
        msg = enc
        for _ in range(num_layers):
            m3 = msg.reshape(B, n_agents, -1)
            agg = jnp.einsum("ij,bjh->bih", adj.astype(cdt), m3.astype(cdt),
                             preferred_element_type=f32).reshape(msg.shape)
            msg = jnp.maximum(mm(agg, wm), 0.0)
        hcat = jnp.concatenate([enc, msg], axis=-1)
        return jnp.maximum(mm(hcat, wp) + bp, 0.0)

    p = params
    h_a = channel(x[:, :input_shape_a],
                  p["wea"], p["bea"], p["wma"], p["wpa"], p["bpa"])
    h_b = channel(x[:, input_shape_a:],
                  p["web"], p["beb"], p["wmb"], p["wpb"], p["bpb"])
    h = jnp.concatenate([h_a, h_b], axis=-1)
    return mm(h, p["wact"]) + p["bact"], h


def _run_case(x, adj, params, *, n_agents, num_layers, input_shape_a,
              hidden_dim, n_actions):
    N = x.shape[0]
    geom = compute_geometry(N, n_agents)
    consts = prepare_constants(adj, params, geom, n_agents=n_agents,
                               num_layers=num_layers, hidden_dim=hidden_dim,
                               n_actions=n_actions)
    packed = dual_channel_gnn_forward(x, consts, geom, num_layers=num_layers,
                                      hidden_dim=hidden_dim,
                                      n_actions=n_actions)
    jax.block_until_ready(packed)
    act, h = unpack_outputs(packed, N, hidden_dim, n_actions)
    act_ref, h_ref = _reference_forward(x, adj, params, n_agents=n_agents,
                                        num_layers=num_layers,
                                        input_shape_a=input_shape_a)
    assert act.shape == (N, n_actions) and h.shape == (N, 2 * hidden_dim)
    assert jnp.allclose(act, act_ref, atol=2e-2, rtol=2e-2)
    assert jnp.allclose(h, h_ref, atol=2e-2, rtol=2e-2)


if __name__ == "__main__":
    n_agents = 4
    hidden_dim, n_actions, num_layers = 32, 8, 2
    input_shape, capability_shape = 16, 4
    input_shape_a = input_shape - capability_shape

    key = jax.random.PRNGKey(0)
    kx1, kx2, kadj, kp = jax.random.split(key, 4)

    # symmetric 0/1 adjacency, no self-loops (normalize_adj_matrix=False path)
    bits = (jax.random.uniform(kadj, (n_agents, n_agents)) > 0.5).astype(jnp.float32)
    adj = jnp.triu(bits, 1)
    adj = adj + adj.T

    params = init_params(kp, input_shape_a, capability_shape, hidden_dim,
                         n_actions)

    # Case 1: small RL-inference shape (batch=2 -> 8 rows; single grid step).
    x_small = jax.random.normal(kx1, (2 * n_agents, input_shape), jnp.float32)
    _run_case(x_small, adj, params, n_agents=n_agents, num_layers=num_layers,
              input_shape_a=input_shape_a, hidden_dim=hidden_dim,
              n_actions=n_actions)

    # Case 2: larger batch exercising the chunked comm loop and >=2 grid steps.
    x_big = jax.random.normal(kx2, (256 * n_agents, input_shape), jnp.float32)
    _run_case(x_big, adj, params, n_agents=n_agents, num_layers=num_layers,
              input_shape_a=input_shape_a, hidden_dim=hidden_dim,
              n_actions=n_actions)

    print("KERNEL_OK")
</pallas_src>

<mosaic_0001>
module attributes {stable_mosaic.version = 11 : i64} {
  func.func @_dual_gnn_kernel(%arg0: i32, %arg1: memref<16x16xf32, #tpu.memory_space<vmem>>, %arg2: memref<16x16xbf16, #tpu.memory_space<vmem>>, %arg3: memref<16x64xbf16, #tpu.memory_space<vmem>>, %arg4: memref<1x64xf32, #tpu.memory_space<vmem>>, %arg5: memref<64x64xbf16, #tpu.memory_space<vmem>>, %arg6: memref<64x128xbf16, #tpu.memory_space<vmem>>, %arg7: memref<64x128xbf16, #tpu.memory_space<vmem>>, %arg8: memref<1x128xf32, #tpu.memory_space<vmem>>, %arg9: memref<128x128xbf16, #tpu.memory_space<vmem>>, %arg10: memref<1x128xf32, #tpu.memory_space<vmem>>, %arg11: memref<16x128xbf16, #tpu.memory_space<vmem>>) attributes {dimension_semantics = [#tpu.dimension_semantics<parallel>], iteration_bounds = array<i64: 1>, scalar_prefetch = 0 : i64, scratch_operands = 0 : i64, tpu.core_type = #tpu.core_type<tc>, window_params = [{transform_indices = @transform_0, window_bounds = array<i64: 16, 16>}, {pipeline_mode = #tpu.pipeline_mode<synchronous>, transform_indices = @transform_1, window_bounds = array<i64: 16, 16>}, {pipeline_mode = #tpu.pipeline_mode<synchronous>, transform_indices = @transform_2, window_bounds = array<i64: 16, 64>}, {pipeline_mode = #tpu.pipeline_mode<synchronous>, transform_indices = @transform_3, window_bounds = array<i64: 1, 64>}, {pipeline_mode = #tpu.pipeline_mode<synchronous>, transform_indices = @transform_4, window_bounds = array<i64: 64, 64>}, {pipeline_mode = #tpu.pipeline_mode<synchronous>, transform_indices = @transform_5, window_bounds = array<i64: 64, 128>}, {pipeline_mode = #tpu.pipeline_mode<synchronous>, transform_indices = @transform_6, window_bounds = array<i64: 64, 128>}, {pipeline_mode = #tpu.pipeline_mode<synchronous>, transform_indices = @transform_7, window_bounds = array<i64: 1, 128>}, {pipeline_mode = #tpu.pipeline_mode<synchronous>, transform_indices = @transform_8, window_bounds = array<i64: 128, 128>}, {pipeline_mode = #tpu.pipeline_mode<synchronous>, transform_indices = @transform_9, window_bounds = array<i64: 1, 128>}, {transform_indices = @transform_10, window_bounds = array<i64: 16, 128>}]} {
    %c0 = arith.constant 0 : index
    %c0_0 = arith.constant 0 : index
    %0 = vector.load %arg2[%c0, %c0_0] : memref<16x16xbf16, #tpu.memory_space<vmem>>, vector<16x16xbf16>
    %c0_1 = arith.constant 0 : index
    %c0_2 = arith.constant 0 : index
    %1 = vector.load %arg3[%c0_1, %c0_2] : memref<16x64xbf16, #tpu.memory_space<vmem>>, vector<16x64xbf16>
    %c0_3 = arith.constant 0 : index
    %c0_4 = arith.constant 0 : index
    %2 = vector.load %arg4[%c0_3, %c0_4] : memref<1x64xf32, #tpu.memory_space<vmem>>, vector<1x64xf32>
    %c0_5 = arith.constant 0 : index
    %c0_6 = arith.constant 0 : index
    %3 = vector.load %arg5[%c0_5, %c0_6] : memref<64x64xbf16, #tpu.memory_space<vmem>>, vector<64x64xbf16>
    %c0_7 = arith.constant 0 : index
    %c0_8 = arith.constant 0 : index
    %4 = vector.load %arg6[%c0_7, %c0_8] : memref<64x128xbf16, #tpu.memory_space<vmem>>, vector<64x128xbf16>
    %c0_9 = arith.constant 0 : index
    %c0_10 = arith.constant 0 : index
    %5 = vector.load %arg7[%c0_9, %c0_10] : memref<64x128xbf16, #tpu.memory_space<vmem>>, vector<64x128xbf16>
    %c0_11 = arith.constant 0 : index
    %c0_12 = arith.constant 0 : index
    %6 = vector.load %arg8[%c0_11, %c0_12] : memref<1x128xf32, #tpu.memory_space<vmem>>, vector<1x128xf32>
    %c0_13 = arith.constant 0 : index
    %c0_14 = arith.constant 0 : index
    %7 = vector.load %arg9[%c0_13, %c0_14] : memref<128x128xbf16, #tpu.memory_space<vmem>>, vector<128x128xbf16>
    %c0_15 = arith.constant 0 : index
    %c0_16 = arith.constant 0 : index
    %8 = vector.load %arg10[%c0_15, %c0_16] : memref<1x128xf32, #tpu.memory_space<vmem>>, vector<1x128xf32>
    %c0_17 = arith.constant 0 : index
    %c0_18 = arith.constant 0 : index
    %9 = vector.load %arg1[%c0_17, %c0_18] : memref<16x16xf32, #tpu.memory_space<vmem>>, vector<16x16xf32>
    %10 = arith.truncf %9 : vector<16x16xf32> to vector<16x16xbf16>
    %cst = arith.constant dense<0.000000e+00> : vector<16x64xf32>
    %11 = tpu.matmul %10, %1, %cst {dimension_numbers = #tpu.dot_dimension_numbers<[1], [0], [0], [1], [0, 0, 1, 1], [], []>} : vector<16x16xbf16>, vector<16x64xbf16>, vector<16x64xf32> -> vector<16x64xf32>
    %12 = vector.broadcast %2 : vector<1x64xf32> to vector<16x64xf32>
    %13 = arith.addf %11, %12 : vector<16x64xf32>
    %cst_19 = arith.constant 0.000000e+00 : f32
    %14 = vector.broadcast %cst_19 : f32 to vector<16x64xf32>
    %15 = arith.maximumf %13, %14 : vector<16x64xf32>
    %16 = arith.truncf %15 : vector<16x64xf32> to vector<16x64xbf16>
    %cst_20 = arith.constant dense<0.000000e+00> : vector<16x128xf32>
    %17 = tpu.matmul %16, %4, %cst_20 {dimension_numbers = #tpu.dot_dimension_numbers<[1], [0], [0], [1], [0, 0, 1, 1], [], []>} : vector<16x64xbf16>, vector<64x128xbf16>, vector<16x128xf32> -> vector<16x128xf32>
    %cst_21 = arith.constant dense<0.000000e+00> : vector<16x64xf32>
    %18 = tpu.matmul %0, %16, %cst_21 {dimension_numbers = #tpu.dot_dimension_numbers<[1], [0], [0], [1], [0, 0, 1, 1], [], []>} : vector<16x16xbf16>, vector<16x64xbf16>, vector<16x64xf32> -> vector<16x64xf32>
    %19 = arith.truncf %18 : vector<16x64xf32> to vector<16x64xbf16>
    %cst_22 = arith.constant dense<0.000000e+00> : vector<16x64xf32>
    %20 = tpu.matmul %19, %3, %cst_22 {dimension_numbers = #tpu.dot_dimension_numbers<[1], [0], [0], [1], [0, 0, 1, 1], [], []>} : vector<16x64xbf16>, vector<64x64xbf16>, vector<16x64xf32> -> vector<16x64xf32>
    %cst_23 = arith.constant 0.000000e+00 : f32
    %21 = vector.broadcast %cst_23 : f32 to vector<16x64xf32>
    %22 = arith.maximumf %20, %21 : vector<16x64xf32>
    %23 = arith.truncf %22 : vector<16x64xf32> to vector<16x64xbf16>
    %cst_24 = arith.constant dense<0.000000e+00> : vector<16x64xf32>
    %24 = tpu.matmul %0, %23, %cst_24 {dimension_numbers = #tpu.dot_dimension_numbers<[1], [0], [0], [1], [0, 0, 1, 1], [], []>} : vector<16x16xbf16>, vector<16x64xbf16>, vector<16x64xf32> -> vector<16x64xf32>
    %25 = arith.truncf %24 : vector<16x64xf32> to vector<16x64xbf16>
    %cst_25 = arith.constant dense<0.000000e+00> : vector<16x64xf32>
    %26 = tpu.matmul %25, %3, %cst_25 {dimension_numbers = #tpu.dot_dimension_numbers<[1], [0], [0], [1], [0, 0, 1, 1], [], []>} : vector<16x64xbf16>, vector<64x64xbf16>, vector<16x64xf32> -> vector<16x64xf32>
    %cst_26 = arith.constant 0.000000e+00 : f32
    %27 = vector.broadcast %cst_26 : f32 to vector<16x64xf32>
    %28 = arith.maximumf %26, %27 : vector<16x64xf32>
    %29 = arith.truncf %28 : vector<16x64xf32> to vector<16x64xbf16>
    %cst_27 = arith.constant dense<0.000000e+00> : vector<16x128xf32>
    %30 = tpu.matmul %29, %5, %cst_27 {dimension_numbers = #tpu.dot_dimension_numbers<[1], [0], [0], [1], [0, 0, 1, 1], [], []>} : vector<16x64xbf16>, vector<64x128xbf16>, vector<16x128xf32> -> vector<16x128xf32>
    %31 = arith.addf %17, %30 : vector<16x128xf32>
    %32 = vector.broadcast %6 : vector<1x128xf32> to vector<16x128xf32>
    %33 = arith.addf %31, %32 : vector<16x128xf32>
    %cst_28 = arith.constant 0.000000e+00 : f32
    %34 = vector.broadcast %cst_28 : f32 to vector<16x128xf32>
    %35 = arith.maximumf %33, %34 : vector<16x128xf32>
    %36 = arith.truncf %35 : vector<16x128xf32> to vector<16x128xbf16>
    %cst_29 = arith.constant dense<0.000000e+00> : vector<16x128xf32>
    %37 = tpu.matmul %36, %7, %cst_29 {dimension_numbers = #tpu.dot_dimension_numbers<[1], [0], [0], [1], [0, 0, 1, 1], [], []>} : vector<16x128xbf16>, vector<128x128xbf16>, vector<16x128xf32> -> vector<16x128xf32>
    %38 = vector.broadcast %8 : vector<1x128xf32> to vector<16x128xf32>
    %39 = arith.addf %37, %38 : vector<16x128xf32>
    %40 = arith.addf %35, %39 : vector<16x128xf32>
    %41 = arith.truncf %40 : vector<16x128xf32> to vector<16x128xbf16>
    %c0_30 = arith.constant 0 : index
    %c0_31 = arith.constant 0 : index
    %42 = vector.load %arg11[%c0_30, %c0_31] : memref<16x128xbf16, #tpu.memory_space<vmem>>, vector<16x128xbf16>
    tpu.vector_store %arg11[%c0_30, %c0_31], %41 {strides = array<i32>} : memref<16x128xbf16, #tpu.memory_space<vmem>>, vector<16x128xbf16>,
    return
  }
  func.func @transform_0(%arg0: i32) -> (i32, i32) {
    %c0_i32 = arith.constant 0 : i32
    %c0_i32_0 = arith.constant 0 : i32
    return %arg0, %c0_i32 : i32, i32
  }
  func.func @transform_1(%arg0: i32) -> (i32, i32) {
    %c0_i32 = arith.constant 0 : i32
    %c0_i32_0 = arith.constant 0 : i32
    %c0_i32_1 = arith.constant 0 : i32
    return %c0_i32, %c0_i32_0 : i32, i32
  }
  func.func @transform_2(%arg0: i32) -> (i32, i32) {
    %c0_i32 = arith.constant 0 : i32
    %c0_i32_0 = arith.constant 0 : i32
    %c0_i32_1 = arith.constant 0 : i32
    return %c0_i32, %c0_i32_0 : i32, i32
  }
  func.func @transform_3(%arg0: i32) -> (i32, i32) {
    %c0_i32 = arith.constant 0 : i32
    %c0_i32_0 = arith.constant 0 : i32
    %c0_i32_1 = arith.constant 0 : i32
    return %c0_i32, %c0_i32_0 : i32, i32
  }
  func.func @transform_4(%arg0: i32) -> (i32, i32) {
    %c0_i32 = arith.constant 0 : i32
    %c0_i32_0 = arith.constant 0 : i32
    %c0_i32_1 = arith.constant 0 : i32
    return %c0_i32, %c0_i32_0 : i32, i32
  }
  func.func @transform_5(%arg0: i32) -> (i32, i32) {
    %c0_i32 = arith.constant 0 : i32
    %c0_i32_0 = arith.constant 0 : i32
    %c0_i32_1 = arith.constant 0 : i32
    return %c0_i32, %c0_i32_0 : i32, i32
  }
  func.func @transform_6(%arg0: i32) -> (i32, i32) {
    %c0_i32 = arith.constant 0 : i32
    %c0_i32_0 = arith.constant 0 : i32
    %c0_i32_1 = arith.constant 0 : i32
    return %c0_i32, %c0_i32_0 : i32, i32
  }
  func.func @transform_7(%arg0: i32) -> (i32, i32) {
    %c0_i32 = arith.constant 0 : i32
    %c0_i32_0 = arith.constant 0 : i32
    %c0_i32_1 = arith.constant 0 : i32
    return %c0_i32, %c0_i32_0 : i32, i32
  }
  func.func @transform_8(%arg0: i32) -> (i32, i32) {
    %c0_i32 = arith.constant 0 : i32
    %c0_i32_0 = arith.constant 0 : i32
    %c0_i32_1 = arith.constant 0 : i32
    return %c0_i32, %c0_i32_0 : i32, i32
  }
  func.func @transform_9(%arg0: i32) -> (i32, i32) {
    %c0_i32 = arith.constant 0 : i32
    %c0_i32_0 = arith.constant 0 : i32
    %c0_i32_1 = arith.constant 0 : i32
    return %c0_i32, %c0_i32_0 : i32, i32
  }
  func.func @transform_10(%arg0: i32) -> (i32, i32) {
    %c0_i32 = arith.constant 0 : i32
    %c0_i32_0 = arith.constant 0 : i32
    return %arg0, %c0_i32 : i32, i32
  }
}

</mosaic_0001>

<llo_original>
// kernel: tpu_custom_call.1
$region0: #{tpu_custom_call.1}
  #allocation0 [shape = 'u32[]', space=smem, size = 0x4, offset = 0x4, fixed_abs, tag = 'smem constant byte address 0x4 - core index']
  #allocation1 [shape = 'u32[72,128]{1,0:T(1,128)}', space=vmem, size = 0x9000, scoped, tag = 'internal scratch']
  %s0 = inlined_call_operand.hbm [shape: f32[16,16], index: 0, kind: input, shape index: {}]
  %s1 = inlined_call_operand.hbm [shape: bf16[16,16], index: 1, kind: input, shape index: {}]
  %s2 = inlined_call_operand.hbm [shape: bf16[16,64], index: 2, kind: input, shape index: {}]
  %s3 = inlined_call_operand.vmem [shape: f32[1,64], index: 3, kind: input, shape index: {}]
  %s4 = inlined_call_operand.hbm [shape: bf16[64,64], index: 4, kind: input, shape index: {}]
  %s5 = inlined_call_operand.hbm [shape: bf16[64,128], index: 5, kind: input, shape index: {}]
  %s6 = inlined_call_operand.hbm [shape: bf16[64,128], index: 6, kind: input, shape index: {}]
  %s7 = inlined_call_operand.vmem [shape: f32[1,128], index: 7, kind: input, shape index: {}]
  %s8 = inlined_call_operand.hbm [shape: bf16[128,128], index: 8, kind: input, shape index: {}]
  %s9 = inlined_call_operand.vmem [shape: f32[1,128], index: 9, kind: input, shape index: {}]
  %s10 = inlined_call_operand.hbm [shape: bf16[16,128], index: 10, kind: output, shape index: {}]
  %s11 = sld [smem:[#allocation0]]
  $region78: #{tpu_custom_call.1} parent=0
    _
  %s13 = ssub.s32 1, %s11
  %s14 = scalar_select 0, %s13, %s11
  $region1: #{tpu_custom_call.1} parent=0
    #allocation2 [shape = 'u8[8192]{0}', space=vmem, size = 0x2000, scoped, tag = 'input window, operand 0, single buffered']
    #allocation3 [shape = 's32[1]{0}', space=sflag, size = 0x4, scoped, tag = 'scoped memory for tpu_custom_call.1']
    #allocation4 [shape = 's32[1]{0}', space=sflag, size = 0x4, scoped, tag = 'scoped memory for tpu_custom_call.1']
    #allocation5 [shape = 'u8[4096]{0}', space=vmem, size = 0x1000, scoped, tag = 'input window, operand 1, single buffered']
    #allocation6 [shape = 's32[1]{0}', space=sflag, size = 0x4, scoped, tag = 'scoped memory for tpu_custom_call.1']
    #allocation7 [shape = 'u8[4096]{0}', space=vmem, size = 0x1000, scoped, tag = 'input window, operand 2, single buffered']
    #allocation8 [shape = 'u8[16384]{0}', space=vmem, size = 0x4000, scoped, tag = 'input window, operand 4, single buffered']
    #allocation9 [shape = 's32[1]{0}', space=sflag, size = 0x4, scoped, tag = 'scoped memory for tpu_custom_call.1']
    #allocation10 [shape = 'u8[16384]{0}', space=vmem, size = 0x4000, scoped, tag = 'input window, operand 5, single buffered']
    #allocation11 [shape = 'u8[16384]{0}', space=vmem, size = 0x4000, scoped, tag = 'input window, operand 6, single buffered']
    #allocation12 [shape = 's32[1]{0}', space=sflag, size = 0x4, scoped, tag = 'scoped memory for tpu_custom_call.1']
    #allocation13 [shape = 'u8[32768]{0}', space=vmem, size = 0x8000, scoped, tag = 'input window, operand 8, single buffered']
    #allocation14 [shape = 'u8[4096]{0}', space=vmem, size = 0x1000, scoped, tag = 'output window, operand 0, single buffered']
    %15 = vsyncpa [#allocation3], 0
    %16 = vsyncpa [#allocation6], 0
    %17 = vsyncpa [#allocation9], 0
    %18 = vsyncpa [#allocation12], 0
    %19 = vsyncpa [#allocation4], 0
    // Predicated region
    $region2: #{tpu_custom_call.1} parent=1 // pred_check
      _
    $region3: #{tpu_custom_call.1} parent=1 // pred_check_branch
      %21 = sbr.rel (0) target = $region5
    $region4: #{tpu_custom_call.1} parent=1 // pred_region
      %23 = vsyncadd [#allocation3], 0
      %s24 = sshll.u32 %s0, 4
      %s25 = int_to_ptr.hbm [resolvable:$true] %s24
      %s26 = sshll.u32 [#allocation2], 4
      %s27 = int_to_ptr.vmem [resolvable:$true] %s26
      %32 = dma.hbm_to_vmem [thread:$0]  %s25, 256, %s27, [#allocation3], 128, 128, 8
    $region5: #{tpu_custom_call.1} parent=1 // pred_fallthru
      _
    // Predicated region
    $region6: #{tpu_custom_call.1} parent=1 // pred_check
      _
    $region7: #{tpu_custom_call.1} parent=1 // pred_check_branch
      %34 = sbr.rel (0) target = $region9
    $region8: #{tpu_custom_call.1} parent=1 // pred_region
      %36 = vsyncadd [#allocation6], 0
      %s37 = sshll.u32 %s1, 4
      %s38 = int_to_ptr.hbm [resolvable:$true] %s37
      %s39 = sshll.u32 [#allocation5], 4
      %s40 = int_to_ptr.vmem [resolvable:$true] %s39
      %45 = dma.hbm_to_vmem [thread:$0]  %s38, 128, %s40, [#allocation6], 64, 64, 4
    $region9: #{tpu_custom_call.1} parent=1 // pred_fallthru
      _
    // Predicated region
    $region10: #{tpu_custom_call.1} parent=1 // pred_check
      _
    $region11: #{tpu_custom_call.1} parent=1 // pred_check_branch
      %47 = sbr.rel (0) target = $region13
    $region12: #{tpu_custom_call.1} parent=1 // pred_region
      %49 = vsyncadd [#allocation6], 0
      %s50 = sshll.u32 %s2, 4
      %s51 = int_to_ptr.hbm [resolvable:$true] %s50
      %s52 = sshll.u32 [#allocation7], 4
      %s53 = int_to_ptr.vmem [resolvable:$true] %s52
      %58 = dma.hbm_to_vmem [thread:$0]  %s51, 128, %s53, [#allocation6], 64, 64, 4
    $region13: #{tpu_custom_call.1} parent=1 // pred_fallthru
      _
    // Predicated region
    $region14: #{tpu_custom_call.1} parent=1 // pred_check
      _
    $region15: #{tpu_custom_call.1} parent=1 // pred_check_branch
      %60 = sbr.rel (0) target = $region17
    $region16: #{tpu_custom_call.1} parent=1 // pred_region
      _
    $region17: #{tpu_custom_call.1} parent=1 // pred_fallthru
      _
    // Predicated region
    $region18: #{tpu_custom_call.1} parent=1 // pred_check
      _
    $region19: #{tpu_custom_call.1} parent=1 // pred_check_branch
      %62 = sbr.rel (0) target = $region21
    $region20: #{tpu_custom_call.1} parent=1 // pred_region
      %64 = vsyncadd [#allocation9], 0
      %s65 = sshll.u32 %s4, 4
      %s66 = int_to_ptr.hbm [resolvable:$true] %s65
      %s67 = sshll.u32 [#allocation8], 4
      %s68 = int_to_ptr.vmem [resolvable:$true] %s67
      %73 = dma.hbm_to_vmem [thread:$0]  %s66, 512, %s68, [#allocation9], 64, 64, 4
    $region21: #{tpu_custom_call.1} parent=1 // pred_fallthru
      _
    // Predicated region
    $region22: #{tpu_custom_call.1} parent=1 // pred_check
      _
    $region23: #{tpu_custom_call.1} parent=1 // pred_check_branch
      %75 = sbr.rel (0) target = $region25
    $region24: #{tpu_custom_call.1} parent=1 // pred_region
      %77 = vsyncadd [#allocation9], 0
      %s78 = sshll.u32 %s5, 4
      %s79 = int_to_ptr.hbm [resolvable:$true] %s78
      %s80 = sshll.u32 [#allocation10], 4
      %s81 = int_to_ptr.vmem [resolvable:$true] %s80
      %86 = dma.hbm_to_vmem [thread:$0]  %s79, 512, %s81, [#allocation9], 64, 64, 4
    $region25: #{tpu_custom_call.1} parent=1 // pred_fallthru
      _
    // Predicated region
    $region26: #{tpu_custom_call.1} parent=1 // pred_check
      _
    $region27: #{tpu_custom_call.1} parent=1 // pred_check_branch
      %88 = sbr.rel (0) target = $region29
    $region28: #{tpu_custom_call.1} parent=1 // pred_region
      %90 = vsyncadd [#allocation12], 0
      %s91 = sshll.u32 %s6, 4
      %s92 = int_to_ptr.hbm [resolvable:$true] %s91
      %s93 = sshll.u32 [#allocation11], 4
      %s94 = int_to_ptr.vmem [resolvable:$true] %s93
      %99 = dma.hbm_to_vmem [thread:$0]  %s92, 512, %s94, [#allocation12], 64, 64, 4
    $region29: #{tpu_custom_call.1} parent=1 // pred_fallthru
      _
    // Predicated region
    $region30: #{tpu_custom_call.1} parent=1 // pred_check
      _
    $region31: #{tpu_custom_call.1} parent=1 // pred_check_branch
      %101 = sbr.rel (0) target = $region33
    $region32: #{tpu_custom_call.1} parent=1 // pred_region
      _
    $region33: #{tpu_custom_call.1} parent=1 // pred_fallthru
      _
    // Predicated region
    $region34: #{tpu_custom_call.1} parent=1 // pred_check
      _
    $region35: #{tpu_custom_call.1} parent=1 // pred_check_branch
      %103 = sbr.rel (0) target = $region37
    $region36: #{tpu_custom_call.1} parent=1 // pred_region
      %105 = vsyncadd [#allocation12], 0
      %s106 = sshll.u32 %s8, 4
      %s107 = int_to_ptr.hbm [resolvable:$true] %s106
      %s108 = sshll.u32 [#allocation13], 4
      %s109 = int_to_ptr.vmem [resolvable:$true] %s108
      %114 = dma.hbm_to_vmem [thread:$0]  %s107, 1024, %s109, [#allocation12], 64, 64, 4
    $region37: #{tpu_custom_call.1} parent=1 // pred_fallthru
      _
    // Predicated region
    $region38: #{tpu_custom_call.1} parent=1 // pred_check
      _
    $region39: #{tpu_custom_call.1} parent=1 // pred_check_branch
      %116 = sbr.rel (0) target = $region41
    $region40: #{tpu_custom_call.1} parent=1 // pred_region
      _
    $region41: #{tpu_custom_call.1} parent=1 // pred_fallthru
      _
    // Predicated region
    $region42: #{tpu_custom_call.1} parent=1 // pred_check
      _
    $region43: #{tpu_custom_call.1} parent=1 // pred_check_branch
      %118 = sbr.rel (0) target = $region45
    $region44: #{tpu_custom_call.1} parent=1 // pred_region
      %120 = dma.done [#allocation3], 256
    $region45: #{tpu_custom_call.1} parent=1 // pred_fallthru
      _
    // Predicated region
    $region46: #{tpu_custom_call.1} parent=1 // pred_check
      _
    $region47: #{tpu_custom_call.1} parent=1 // pred_check_branch
      %122 = sbr.rel (0) target = $region49
    $region48: #{tpu_custom_call.1} parent=1 // pred_region
      %124 = dma.done [#allocation6], 128
    $region49: #{tpu_custom_call.1} parent=1 // pred_fallthru
      _
    // Predicated region
    $region50: #{tpu_custom_call.1} parent=1 // pred_check
      _
    $region51: #{tpu_custom_call.1} parent=1 // pred_check_branch
      %126 = sbr.rel (0) target = $region53
    $region52: #{tpu_custom_call.1} parent=1 // pred_region
      %128 = dma.done [#allocation6], 128
    $region53: #{tpu_custom_call.1} parent=1 // pred_fallthru
      _
    // Predicated region
    $region54: #{tpu_custom_call.1} parent=1 // pred_check
      _
    $region55: #{tpu_custom_call.1} parent=1 // pred_check_branch
      %130 = sbr.rel (0) target = $region57
    $region56: #{tpu_custom_call.1} parent=1 // pred_region
      %132 = dma.done [#allocation9], 512
    $region57: #{tpu_custom_call.1} parent=1 // pred_fallthru
      _
    // Predicated region
    $region58: #{tpu_custom_call.1} parent=1 // pred_check
      _
    $region59: #{tpu_custom_call.1} parent=1 // pred_check_branch
      %134 = sbr.rel (0) target = $region61
    $region60: #{tpu_custom_call.1} parent=1 // pred_region
      %136 = dma.done [#allocation9], 512
    $region61: #{tpu_custom_call.1} parent=1 // pred_fallthru
      _
    // Predicated region
    $region62: #{tpu_custom_call.1} parent=1 // pred_check
      _
    $region63: #{tpu_custom_call.1} parent=1 // pred_check_branch
      %138 = sbr.rel (0) target = $region65
    $region64: #{tpu_custom_call.1} parent=1 // pred_region
      %140 = dma.done [#allocation12], 512
    $region65: #{tpu_custom_call.1} parent=1 // pred_fallthru
      _
    // Predicated region
    $region66: #{tpu_custom_call.1} parent=1 // pred_check
      _
    $region67: #{tpu_custom_call.1} parent=1 // pred_check_branch
      %142 = sbr.rel (0) target = $region69
    $region68: #{tpu_custom_call.1} parent=1 // pred_region
      %144 = dma.done [#allocation12], 1024
    $region69: #{tpu_custom_call.1} parent=1 // pred_fallthru
      _
    %v146 = vld [vmem:[#allocation5] sm:$0xf]
    %v147 = vld [vmem:[#allocation5 + $0x4] sm:$0xf]
    %v148 = vld [vmem:[#allocation7] sm:$0xf]
    %v149 = vld [vmem:[#allocation7 + $0x4] sm:$0xf]
    %v150 = vld [vmem:[%s3] sm:$0x1]
    %v151 = vld [vmem:[#allocation8] sm:$0xf]
    %v152 = vld [vmem:[#allocation8 + $0x4] sm:$0xf]
    %v153 = vld [vmem:[#allocation8 + $0x8] sm:$0xf]
    %v154 = vld [vmem:[#allocation8 + $0xc] sm:$0xf]
    %v155 = vld [vmem:[#allocation8 + $0x10] sm:$0xf]
    %v156 = vld [vmem:[#allocation8 + $0x14] sm:$0xf]
    %v157 = vld [vmem:[#allocation8 + $0x18] sm:$0xf]
    %v158 = vld [vmem:[#allocation8 + $0x1c] sm:$0xf]
    %v159 = vld [vmem:[#allocation10] sm:$0xf]
    %v160 = vld [vmem:[#allocation10 + $0x4] sm:$0xf]
    %v161 = vld [vmem:[#allocation10 + $0x8] sm:$0xf]
    %v162 = vld [vmem:[#allocation10 + $0xc] sm:$0xf]
    %v163 = vld [vmem:[#allocation10 + $0x10] sm:$0xf]
    %v164 = vld [vmem:[#allocation10 + $0x14] sm:$0xf]
    %v165 = vld [vmem:[#allocation10 + $0x18] sm:$0xf]
    %v166 = vld [vmem:[#allocation10 + $0x1c] sm:$0xf]
    %v167 = vld [vmem:[#allocation11] sm:$0xf]
    %v168 = vld [vmem:[#allocation11 + $0x4] sm:$0xf]
    %v169 = vld [vmem:[#allocation11 + $0x8] sm:$0xf]
    %v170 = vld [vmem:[#allocation11 + $0xc] sm:$0xf]
    %v171 = vld [vmem:[#allocation11 + $0x10] sm:$0xf]
    %v172 = vld [vmem:[#allocation11 + $0x14] sm:$0xf]
    %v173 = vld [vmem:[#allocation11 + $0x18] sm:$0xf]
    %v174 = vld [vmem:[#allocation11 + $0x1c] sm:$0xf]
    %v175 = vld [vmem:[%s7] sm:$0x1]
    %v176 = vld [vmem:[#allocation13] sm:$0xf]
    %v177 = vld [vmem:[#allocation13 + $0x4] sm:$0xf]
    %v178 = vld [vmem:[#allocation13 + $0x8] sm:$0xf]
    %v179 = vld [vmem:[#allocation13 + $0xc] sm:$0xf]
    %v180 = vld [vmem:[#allocation13 + $0x10] sm:$0xf]
    %v181 = vld [vmem:[#allocation13 + $0x14] sm:$0xf]
    %v182 = vld [vmem:[#allocation13 + $0x18] sm:$0xf]
    %v183 = vld [vmem:[#allocation13 + $0x1c] sm:$0xf]
    %v184 = vld [vmem:[#allocation13 + $0x20] sm:$0xf]
    %v185 = vld [vmem:[#allocation13 + $0x24] sm:$0xf]
    %v186 = vld [vmem:[#allocation13 + $0x28] sm:$0xf]
    %v187 = vld [vmem:[#allocation13 + $0x2c] sm:$0xf]
    %v188 = vld [vmem:[#allocation13 + $0x30] sm:$0xf]
    %v189 = vld [vmem:[#allocation13 + $0x34] sm:$0xf]
    %v190 = vld [vmem:[#allocation13 + $0x38] sm:$0xf]
    %v191 = vld [vmem:[#allocation13 + $0x3c] sm:$0xf]
    %v192 = vld [vmem:[%s9] sm:$0x1]
    %v193 = vld [vmem:[#allocation2] sm:$0xff]
    %v194 = vld [vmem:[#allocation2 + $0x8] sm:$0xff]
    %v195 = vpack.c.bf16 %v194, %v193
    %v197 = vperm.slane %v150, 0
    %v201 = vunpack.c.l.b16 %v148
    %v202 = vunpack.c.l.b16 %v149
    %v203 = vpack.c.b16 %v202, %v201
    %vm205 = vcmask 130048
    %v207 = vsel %vm205, %v195, 0
    %209 = vmatpush.bf16.msra.mxu0 0
    %210 = vmatpush.bf16.msra.mxu0 0
    %211 = vmatpush.bf16.msra.mxu0 0
    %212 = vmatpush.bf16.msra.mxu0 0
    %213 = vmatpush.bf16.msra.mxu0 0
    %214 = vmatpush.bf16.msra.mxu0 0
    %215 = vmatpush.bf16.msra.mxu0 0
    %216 = vmatpush.bf16.msra.mxu0 %v203
    %217 = vmatmul.bf16.gmra.mxu0 %v207
    %v218 = vpop.f32.mrf.mxu0
    %v219 = vadd.f32 %v197, %v218
    %v220 = vpop.f32.mrf.mxu0
    %v221 = vadd.f32 %v197, %v220
    %222 = vdwg.mxu0
    %v223 = vmax.f32 %v219, 0.0
    %v224 = vmax.f32 %v221, 0.0
    %v225 = vpack.c.bf16 %v224, %v223
    %v228 = vunpack.c.l.b16 %v146
    %v229 = vunpack.c.l.b16 %v147
    %v230 = vpack.c.b16 %v229, %v228
    %v232 = vsel %vm205, %v230, 0
    %234 = vmatpush.bf16.msra.mxu0 0
    %235 = vmatpush.bf16.msra.mxu0 0
    %236 = vmatpush.bf16.msra.mxu0 0
    %237 = vmatpush.bf16.msra.mxu0 0
    %238 = vmatpush.bf16.msra.mxu0 0
    %239 = vmatpush.bf16.msra.mxu0 0
    %240 = vmatpush.bf16.msra.mxu0 0
    %241 = vmatpush.bf16.msra.mxu0 %v225
    %242 = vmatmul.bf16.gmra.mxu0 %v232
    %v243 = vpop.f32.mrf.mxu0
    %v244 = vadd.f32 0.0, %v243
    %v245 = vpop.f32.mrf.mxu0
    %v246 = vadd.f32 0.0, %v245
    %247 = vdwg.mxu0
    %v248 = vpack.c.bf16 %v246, %v244
    %v257 = vunpack.c.l.b16 %v151
    %v258 = vunpack.c.l.b16 %v152
    %v259 = vunpack.c.l.b16 %v153
    %v260 = vunpack.c.l.b16 %v154
    %v261 = vunpack.c.l.b16 %v155
    %v262 = vunpack.c.l.b16 %v156
    %v263 = vunpack.c.l.b16 %v157
    %v264 = vunpack.c.l.b16 %v158
    %v265 = vpack.c.b16 %v258, %v257
    %v266 = vpack.c.b16 %v260, %v259
    %v267 = vpack.c.b16 %v262, %v261
    %v268 = vpack.c.b16 %v264, %v263
    %vm273 = vcmask 523264
    %v275 = vsel %vm273, %v248, 0
    %277 = vmatpush.bf16.msra.mxu0 0
    %278 = vmatpush.bf16.msra.mxu0 0
    %279 = vmatpush.bf16.msra.mxu0 0
    %280 = vmatpush.bf16.msra.mxu0 0
    %281 = vmatpush.bf16.msra.mxu0 %v268
    %282 = vmatpush.bf16.msra.mxu0 %v267
    %283 = vmatpush.bf16.msra.mxu0 %v266
    %284 = vmatpush.bf16.msra.mxu0 %v265
    %285 = vmatmul.bf16.gmra.mxu0 %v275
    %v286 = vpop.f32.mrf.mxu0
    %v287 = vadd.f32 0.0, %v286
    %v288 = vpop.f32.mrf.mxu0
    %v289 = vadd.f32 0.0, %v288
    %290 = vdwg.mxu0
    %v291 = vmax.f32 %v287, 0.0
    %v292 = vmax.f32 %v289, 0.0
    %v293 = vpack.c.bf16 %v292, %v291
    %294 = vmatpush.bf16.msra.mxu0 0
    %295 = vmatpush.bf16.msra.mxu0 0
    %296 = vmatpush.bf16.msra.mxu0 0
    %297 = vmatpush.bf16.msra.mxu0 0
    %298 = vmatpush.bf16.msra.mxu0 0
    %299 = vmatpush.bf16.msra.mxu0 0
    %300 = vmatpush.bf16.msra.mxu0 0
    %301 = vmatpush.bf16.msra.mxu0 %v293
    %302 = vmatmul.bf16.gmra.mxu0 %v232
    %v303 = vpop.f32.mrf.mxu0
    %v304 = vadd.f32 0.0, %v303
    %v305 = vpop.f32.mrf.mxu0
    %v306 = vadd.f32 0.0, %v305
    %307 = vdwg.mxu0
    %v308 = vpack.c.bf16 %v306, %v304
    %v310 = vsel %vm273, %v308, 0
    %312 = vmatpush.bf16.msra.mxu0 0
    %313 = vmatpush.bf16.msra.mxu0 0
    %314 = vmatpush.bf16.msra.mxu0 0
    %315 = vmatpush.bf16.msra.mxu0 0
    %316 = vmatpush.bf16.msra.mxu0 %v268
    %317 = vmatpush.bf16.msra.mxu0 %v267
    %318 = vmatpush.bf16.msra.mxu0 %v266
    %319 = vmatpush.bf16.msra.mxu0 %v265
    %320 = vmatmul.bf16.gmra.mxu0 %v310
    %v321 = vpop.f32.mrf.mxu0
    %v322 = vadd.f32 0.0, %v321
    %v323 = vpop.f32.mrf.mxu0
    %v324 = vadd.f32 0.0, %v323
    %325 = vdwg.mxu0
    %v326 = vmax.f32 %v322, 0.0
    %v327 = vmax.f32 %v324, 0.0
    %v328 = vpack.c.bf16 %v327, %v326
    %v337 = vunpack.c.l.b16 %v167
    %v338 = vunpack.c.l.b16 %v168
    %v339 = vunpack.c.l.b16 %v169
    %v340 = vunpack.c.l.b16 %v170
    %v341 = vunpack.c.l.b16 %v171
    %v342 = vunpack.c.l.b16 %v172
    %v343 = vunpack.c.l.b16 %v173
    %v344 = vunpack.c.l.b16 %v174
    %v345 = vpack.c.b16 %v338, %v337
    %v346 = vpack.c.b16 %v340, %v339
    %v347 = vpack.c.b16 %v342, %v341
    %v348 = vpack.c.b16 %v344, %v343
    %v354 = vsel %vm273, %v328, 0
    %356 = vmatpush.bf16.msra.mxu0 0
    %357 = vmatpush.bf16.msra.mxu0 0
    %358 = vmatpush.bf16.msra.mxu0 0
    %359 = vmatpush.bf16.msra.mxu0 0
    %360 = vmatpush.bf16.msra.mxu0 %v348
    %361 = vmatpush.bf16.msra.mxu0 %v347
    %362 = vmatpush.bf16.msra.mxu0 %v346
    %363 = vmatpush.bf16.msra.mxu0 %v345
    %364 = vmatmul.bf16.gmra.mxu0 %v354
    %v365 = vpop.f32.mrf.mxu0
    %v366 = vadd.f32 0.0, %v365
    %v367 = vpop.f32.mrf.mxu0
    %v368 = vadd.f32 0.0, %v367
    %369 = vdwg.mxu0
    %v378 = vunpack.c.l.b16 %v159
    %v379 = vunpack.c.l.b16 %v160
    %v380 = vunpack.c.l.b16 %v161
    %v381 = vunpack.c.l.b16 %v162
    %v382 = vunpack.c.l.b16 %v163
    %v383 = vunpack.c.l.b16 %v164
    %v384 = vunpack.c.l.b16 %v165
    %v385 = vunpack.c.l.b16 %v166
    %v386 = vpack.c.b16 %v379, %v378
    %v387 = vpack.c.b16 %v381, %v380
    %v388 = vpack.c.b16 %v383, %v382
    %v389 = vpack.c.b16 %v385, %v384
    %v395 = vsel %vm273, %v225, 0
    %397 = vmatpush.bf16.msra.mxu0 0
    %398 = vmatpush.bf16.msra.mxu0 0
    %399 = vmatpush.bf16.msra.mxu0 0
    %400 = vmatpush.bf16.msra.mxu0 0
    %401 = vmatpush.bf16.msra.mxu0 %v389
    %402 = vmatpush.bf16.msra.mxu0 %v388
    %403 = vmatpush.bf16.msra.mxu0 %v387
    %404 = vmatpush.bf16.msra.mxu0 %v386
    %405 = vmatmul.bf16.gmra.mxu0 %v395
    %v406 = vpop.f32.mrf.mxu0
    %v407 = vadd.f32 %v366, %v406
    %v408 = vpop.f32.mrf.mxu0
    %v409 = vadd.f32 %v368, %v408
    %410 = vdwg.mxu0
    %v412 = vperm.slane %v175, 0
    %v414 = vadd.f32 %v407, %v412
    %v415 = vadd.f32 %v409, %v412
    %v416 = vmax.f32 %v414, 0.0
    %v417 = vmax.f32 %v415, 0.0
    %v418 = vpack.c.bf16 %v417, %v416
    %v420 = vperm.slane %v192, 0
    %v438 = vunpack.c.l.b16 %v176
    %v439 = vunpack.c.l.b16 %v177
    %v440 = vunpack.c.l.b16 %v178
    %v441 = vunpack.c.l.b16 %v179
    %v442 = vunpack.c.l.b16 %v180
    %v443 = vunpack.c.l.b16 %v181
    %v444 = vunpack.c.l.b16 %v182
    %v445 = vunpack.c.l.b16 %v183
    %v446 = vunpack.c.l.b16 %v184
    %v447 = vunpack.c.l.b16 %v185
    %v448 = vunpack.c.l.b16 %v186
    %v449 = vunpack.c.l.b16 %v187
    %v450 = vunpack.c.l.b16 %v188
    %v451 = vunpack.c.l.b16 %v189
    %v452 = vunpack.c.l.b16 %v190
    %v453 = vunpack.c.l.b16 %v191
    %v454 = vpack.c.b16 %v439, %v438
    %v455 = vpack.c.b16 %v441, %v440
    %v456 = vpack.c.b16 %v443, %v442
    %v457 = vpack.c.b16 %v445, %v444
    %v458 = vpack.c.b16 %v447, %v446
    %v459 = vpack.c.b16 %v449, %v448
    %v460 = vpack.c.b16 %v451, %v450
    %v461 = vpack.c.b16 %v453, %v452
    %470 = vmatpush.bf16.msra.mxu0 %v461
    %471 = vmatpush.bf16.msra.mxu0 %v460
    %472 = vmatpush.bf16.msra.mxu0 %v459
    %473 = vmatpush.bf16.msra.mxu0 %v458
    %474 = vmatpush.bf16.msra.mxu0 %v457
    %475 = vmatpush.bf16.msra.mxu0 %v456
    %476 = vmatpush.bf16.msra.mxu0 %v455
    %477 = vmatpush.bf16.msra.mxu0 %v454
    %478 = vmatmul.bf16.gmra.mxu0 %v418
    %v479 = vpop.f32.mrf.mxu0
    %v480 = vadd.f32 %v420, %v479
    %v481 = vpop.f32.mrf.mxu0
    %v482 = vadd.f32 %v420, %v481
    %483 = vdwg.mxu0
    %v484 = vadd.f32 %v416, %v480
    %v485 = vadd.f32 %v417, %v482
    %v486 = vpack.c.bf16 %v484, %v484
    %v487 = vpack.c.bf16 %v485, %v485
    %488 = vst [vmem:[#allocation14] sm:$0xf] %v486
    %489 = vst [vmem:[#allocation14 + $0x4] sm:$0xf] %v487
    // Predicated region
    $region70: #{tpu_custom_call.1} parent=1 // pred_check
      _
    $region71: #{tpu_custom_call.1} parent=1 // pred_check_branch
      %491 = sbr.rel (0) target = $region73
    $region72: #{tpu_custom_call.1} parent=1 // pred_region
      %493 = vsyncadd [#allocation4], 0
      %s494 = sshll.u32 [#allocation14], 4
      %s495 = int_to_ptr.vmem [resolvable:$true] %s494
      %s496 = sshll.u32 %s10, 4
      %s497 = int_to_ptr.hbm [resolvable:$true] %s496
      %502 = dma.vmem_to_hbm [thread:$0]  %s495, 128, %s497, [#allocation4], 64, 64, 4
    $region73: #{tpu_custom_call.1} parent=1 // pred_fallthru
      _
    // Predicated region
    $region74: #{tpu_custom_call.1} parent=1 // pred_check
      _
    $region75: #{tpu_custom_call.1} parent=1 // pred_check_branch
      %504 = sbr.rel (0) target = $region77
    $region76: #{tpu_custom_call.1} parent=1 // pred_region
      %506 = dma.done [#allocation4], 128
    $region77: #{tpu_custom_call.1} parent=1 // pred_fallthru
      _
    %507 = vsyncpa [#allocation3], 1
    %508 = vsyncpa [#allocation6], 1
    %509 = vsyncpa [#allocation9], 1
    %510 = vsyncpa [#allocation12], 1
    %511 = vsyncpa [#allocation4], 1

</llo_original>
